<compile_context>
chip_gen: v5e
topology: v5e:2x2
jax: 0.10.0
libtpu: 0.0.40
codegen_flags: <defaults>
</compile_context>

<pallas_src>
import numpy as np
import jax
import jax.numpy as jnp
from jax.experimental import pallas as pl
from jax.experimental.pallas import tpu as pltpu


# ----------------------------------------------------------------------------
# Kernels
# ----------------------------------------------------------------------------
def _linear_kernel(x_ref, w_ref, b_ref, o_ref):
    o_ref[...] = (
        jnp.dot(x_ref[...].astype(jnp.bfloat16), w_ref[...].astype(jnp.bfloat16),
                preferred_element_type=jnp.float32)
        + b_ref[...]
    )


def linear(x, w, b):
    m, k = x.shape
    n = w.shape[1]
    return pl.pallas_call(
        _linear_kernel,
        out_shape=jax.ShapeDtypeStruct((m, n), jnp.float32),
        grid=(1,),
        in_specs=[
            pl.BlockSpec((m, k), lambda i: (0, 0)),
            pl.BlockSpec((k, n), lambda i: (0, 0)),
            pl.BlockSpec((1, n), lambda i: (0, 0)),
        ],
        out_specs=pl.BlockSpec((m, n), lambda i: (0, 0)),
    )(x, w, b)


def _attn_block_kernel(x_ref, wqkv_ref, bqkv_ref, dist_ref, mask_ref,
                       wo_ref, bo_ref, wd_ref, bd_ref, o_ref):
    # x: (N, C); wqkv: (C, 3*H*Dh) laid out [q | k | v], head-major inside each group;
    # dist: (D, N, N) channel-major (each channel tile lane-dense);
    # mask: (N, N) additive (0 same subgraph / -1e9 different);
    # wd: (D, H) SMEM scalars; bd: (H,) SMEM; wo: (H*Dh, C); bo: (1, C).
    hd3 = wqkv_ref.shape[1]
    hd = hd3 // 3
    heads = wd_ref.shape[1]
    dh = hd // heads
    dsize = dist_ref.shape[0]

    x = x_ref[...]                                          # (N, C) f32
    qkv = jnp.dot(x.astype(jnp.bfloat16), wqkv_ref[...].astype(jnp.bfloat16),
                  preferred_element_type=jnp.float32) + bqkv_ref[...]   # (N, 3*H*Dh)
    mask_add = mask_ref[...]

    out = x + bo_ref[...]                                   # fused residual + out-proj bias
    for h in range(heads):
        q_h = qkv[:, h * dh:(h + 1) * dh].astype(jnp.bfloat16)
        k_h = qkv[:, hd + h * dh:hd + (h + 1) * dh].astype(jnp.bfloat16)
        v_h = qkv[:, 2 * hd + h * dh:2 * hd + (h + 1) * dh].astype(jnp.bfloat16)

        # per-head distance bias, lane-dense weighted sum over distance channels
        bias = mask_add + bd_ref[h]
        for d in range(dsize):
            bias = bias + wd_ref[d, h] * dist_ref[d]

        # q_h @ k_h.T (scale already folded into Wq) + bias
        logits = jax.lax.dot_general(
            q_h, k_h, dimension_numbers=(((1,), (1,)), ((), ())),
            preferred_element_type=jnp.float32) + bias
        m = jnp.max(logits, axis=-1, keepdims=True)
        p = jnp.exp(logits - m)
        inv = pl.reciprocal(jnp.sum(p, axis=-1, keepdims=True), approx=True)
        attn = (p * inv).astype(jnp.bfloat16)

        ctx = jnp.dot(attn, v_h, preferred_element_type=jnp.float32)     # (N, Dh)
        out = out + jnp.dot(ctx.astype(jnp.bfloat16),
                            wo_ref[h * dh:(h + 1) * dh, :].astype(jnp.bfloat16),
                            preferred_element_type=jnp.float32)
    o_ref[...] = out


def attention_block(x, dist_t, mask_add, p):
    n, c = x.shape
    dsize, heads = p["wd"].shape
    hd = p["wo"].shape[0]
    return pl.pallas_call(
        _attn_block_kernel,
        out_shape=jax.ShapeDtypeStruct((n, c), jnp.float32),
        grid=(1,),
        in_specs=[
            pl.BlockSpec((n, c), lambda i: (0, 0)),
            pl.BlockSpec((c, 3 * hd), lambda i: (0, 0)),
            pl.BlockSpec((1, 3 * hd), lambda i: (0, 0)),
            pl.BlockSpec((dsize, n, n), lambda i: (0, 0, 0)),
            pl.BlockSpec((n, n), lambda i: (0, 0)),
            pl.BlockSpec((hd, c), lambda i: (0, 0)),
            pl.BlockSpec((1, c), lambda i: (0, 0)),
            pl.BlockSpec(memory_space=pltpu.MemorySpace.SMEM),   # wd scalars
            pl.BlockSpec(memory_space=pltpu.MemorySpace.SMEM),   # bd scalars
        ],
        out_specs=pl.BlockSpec((n, c), lambda i: (0, 0)),
    )(x, p["wqkv"], p["bqkv"], dist_t, mask_add, p["wo"], p["bo"], p["wd"], p["bd"])


def _scale_stack_kernel(x_ref, a_ref, m_ref, w_ref, b_ref, o_ref):
    # One subgraph per grid step, node-major layout.
    # x: (L, C); a: (6*3, LPAD, L) shifted pool maps; m: (6, L, LPAD) interp maps;
    # w: (6*3, C, C) conv tap weights (channel-mix form); b: (6, 1, C).
    sf_depth = m_ref.shape[0]
    lpad = a_ref.shape[1]
    c = x_ref.shape[1]

    x0 = x_ref[...]
    cur = x0
    for idx in range(sf_depth):
        cur_bf = cur.astype(jnp.bfloat16)
        acc = jnp.zeros((lpad, c), jnp.float32)
        for t in range(3):
            # channel mix first (lane stays C-dense over full L), then pool+shift along L
            y = jnp.dot(cur_bf, w_ref[idx * 3 + t].astype(jnp.bfloat16),
                        preferred_element_type=jnp.float32)                 # (L, C)
            acc = acc + jnp.dot(a_ref[idx * 3 + t].astype(jnp.bfloat16),
                                y.astype(jnp.bfloat16),
                                preferred_element_type=jnp.float32)          # (LPAD, C)
        z = jnp.maximum(acc + b_ref[idx], 0.0)                               # ReLU(conv)
        cur = cur + jnp.dot(m_ref[idx].astype(jnp.bfloat16), z.astype(jnp.bfloat16),
                            preferred_element_type=jnp.float32)              # linear interp back
    o_ref[...] = x0 + cur                                                    # block residual fused


def scale_features_block(x, A, M, W, b, num_subgraphs, L):
    n, c = x.shape
    return pl.pallas_call(
        _scale_stack_kernel,
        out_shape=jax.ShapeDtypeStruct((n, c), jnp.float32),
        grid=(num_subgraphs,),
        in_specs=[
            pl.BlockSpec((L, c), lambda g: (g, 0)),
            pl.BlockSpec(A.shape, lambda g: (0, 0, 0)),
            pl.BlockSpec(M.shape, lambda g: (0, 0, 0)),
            pl.BlockSpec(W.shape, lambda g: (0, 0, 0)),
            pl.BlockSpec(b.shape, lambda g: (0, 0, 0)),
        ],
        out_specs=pl.BlockSpec((L, c), lambda g: (g, 0)),
        compiler_params=pltpu.CompilerParams(dimension_semantics=("parallel",)),
    )(x, A, M, W, b)


# ----------------------------------------------------------------------------
# Host-side geometry: avg_pool1d / conv shift / F.interpolate(linear) as matrices
# ----------------------------------------------------------------------------
def pool_matrix(L, k):
    lin = L // k
    P = np.zeros((lin, L), np.float32)
    for j in range(lin):
        P[j, j * k:(j + 1) * k] = 1.0 / k
    return P


def interp_matrix(l_out, l_in):
    # torch F.interpolate(mode='linear', align_corners=False)
    M = np.zeros((l_out, l_in), np.float32)
    scale = l_in / l_out
    for i in range(l_out):
        src = max((i + 0.5) * scale - 0.5, 0.0)
        j0 = min(int(np.floor(src)), l_in - 1)
        j1 = min(j0 + 1, l_in - 1)
        lam = src - j0
        M[i, j0] += 1.0 - lam
        M[i, j1] += lam
    return M


def build_scale_geometry(L, sf_depth=6):
    lpad = L // 2                       # largest pooled length (k=2); pad all scales to it
    A = np.zeros((sf_depth * 3, lpad, L), np.float32)
    M = np.zeros((sf_depth, L, lpad), np.float32)
    for idx in range(sf_depth):
        k = 2 ** (idx + 1)
        lin = L // k
        P = pool_matrix(L, k)                                            # (lin, L)
        A[idx * 3 + 0, :lin] = np.eye(lin, k=-1, dtype=np.float32) @ P   # pooled[j-1] (zero pad)
        A[idx * 3 + 1, :lin] = P                                         # pooled[j]
        A[idx * 3 + 2, :lin] = np.eye(lin, k=1, dtype=np.float32) @ P    # pooled[j+1] (zero pad)
        M[idx, :, :lin] = interp_matrix(L, lin)
    return jnp.asarray(A), jnp.asarray(M)


# ----------------------------------------------------------------------------
# Model forward
# ----------------------------------------------------------------------------
def encoder_forward(features, dist_t, mask_add, params, A, M, num_subgraphs, L):
    out = linear(features, params["wp"], params["bp"])                  # preprocessor
    for blk in params["blocks"]:
        # pre_norm branch; bn / local_bn identity (batch_norm=False); dropout = eval identity
        out = attention_block(out, dist_t, mask_add, blk["attn"])       # out + attn(out)
        out = scale_features_block(out, A, M, blk["lw"], blk["lb"],
                                   num_subgraphs, L)                    # out + ScaleFeatures(out)
    return out


# ----------------------------------------------------------------------------
# Deterministic parameter init
# ----------------------------------------------------------------------------
def init_params(key, in_size, size, distance_size, heads, head_dim, depth, sf_depth=6):
    keys = iter(jax.random.split(key, 1024))

    def w(shape, scale):
        return jax.random.normal(next(keys), shape, jnp.float32) * scale

    hd = heads * head_dim
    qscale = 1.0 / np.sqrt(head_dim)                 # fold 1/sqrt(Dh) into Wq / bq
    params = {"wp": w((in_size, size), 1.0 / np.sqrt(in_size)),
              "bp": w((1, size), 0.02),
              "blocks": []}
    for _ in range(depth):
        wq = w((size, hd), 1.0 / np.sqrt(size)) * qscale
        bq = w((1, hd), 0.02) * qscale
        wk = w((size, hd), 1.0 / np.sqrt(size))
        bk = w((1, hd), 0.02)
        wv = w((size, hd), 1.0 / np.sqrt(size))
        bv = w((1, hd), 0.02)
        attn = {
            "wqkv": jnp.concatenate([wq, wk, wv], axis=1),      # (C, 3*H*Dh)
            "bqkv": jnp.concatenate([bq, bk, bv], axis=1),      # (1, 3*H*Dh)
            "wd": w((distance_size, heads), 1.0 / np.sqrt(distance_size)),
            "bd": w((heads,), 0.02),
            "wo": w((hd, size), 1.0 / np.sqrt(hd)),
            "bo": w((1, size), 0.02),
        }
        params["blocks"].append({
            "attn": attn,
            "lw": w((sf_depth * 3, size, size), 1.0 / np.sqrt(3 * size)),
            "lb": w((sf_depth, 1, size), 0.02),
        })
    return params


# ----------------------------------------------------------------------------
if __name__ == "__main__":
    in_size, size, distance_size = 16, 32, 8
    heads, head_dim = 4, 16
    depth = 2                        # encoder blocks
    B, L = 2, 64                     # 2 subgraphs of 64 residues (L % 64 == 0 for 6 pooling scales)
    N = B * L

    key = jax.random.PRNGKey(0)
    kf, kd, kp = jax.random.split(key, 3)
    features = jax.random.normal(kf, (N, in_size), jnp.float32)
    dist = jax.random.normal(kd, (N, N, distance_size), jnp.float32)

    # channel-major distance layout: each (N, N) channel tile is lane-dense in-kernel
    dist_t = jnp.transpose(dist, (2, 0, 1))                      # (D, N, N)

    subgraph = np.repeat(np.arange(B), L)
    same = subgraph[:, None] == subgraph[None, :]
    mask_add = jnp.asarray(np.where(same, 0.0, -1e9).astype(np.float32))

    params = init_params(kp, in_size, size, distance_size, heads, head_dim, depth)
    A, M = build_scale_geometry(L)

    out = encoder_forward(features, dist_t, mask_add, params, A, M, B, L)
    out = jax.block_until_ready(out)

    assert out.shape == (N, size), out.shape
    assert bool(jnp.all(jnp.isfinite(out)))
    print("KERNEL_OK")
</pallas_src>

<mosaic_0001>
module attributes {stable_mosaic.version = 11 : i64} {
  func.func @_linear_kernel(%arg0: i32, %arg1: memref<128x16xf32, #tpu.memory_space<vmem>>, %arg2: memref<16x32xf32, #tpu.memory_space<vmem>>, %arg3: memref<1x32xf32, #tpu.memory_space<vmem>>, %arg4: memref<128x32xf32, #tpu.memory_space<vmem>>) attributes {dimension_semantics = [#tpu.dimension_semantics<arbitrary>], iteration_bounds = array<i64: 1>, scalar_prefetch = 0 : i64, scratch_operands = 0 : i64, tpu.core_type = #tpu.core_type<tc>, window_params = [{pipeline_mode = #tpu.pipeline_mode<synchronous>, transform_indices = @transform_0, window_bounds = array<i64: 128, 16>}, {pipeline_mode = #tpu.pipeline_mode<synchronous>, transform_indices = @transform_1, window_bounds = array<i64: 16, 32>}, {pipeline_mode = #tpu.pipeline_mode<synchronous>, transform_indices = @transform_2, window_bounds = array<i64: 1, 32>}, {pipeline_mode = #tpu.pipeline_mode<synchronous>, transform_indices = @transform_3, window_bounds = array<i64: 128, 32>}]} {
    %c0 = arith.constant 0 : index
    %c0_0 = arith.constant 0 : index
    %0 = vector.load %arg1[%c0, %c0_0] : memref<128x16xf32, #tpu.memory_space<vmem>>, vector<128x16xf32>
    %1 = arith.truncf %0 : vector<128x16xf32> to vector<128x16xbf16>
    %c0_1 = arith.constant 0 : index
    %c0_2 = arith.constant 0 : index
    %2 = vector.load %arg2[%c0_1, %c0_2] : memref<16x32xf32, #tpu.memory_space<vmem>>, vector<16x32xf32>
    %3 = arith.truncf %2 : vector<16x32xf32> to vector<16x32xbf16>
    %cst = arith.constant dense<0.000000e+00> : vector<128x32xf32>
    %4 = tpu.matmul %1, %3, %cst {dimension_numbers = #tpu.dot_dimension_numbers<[1], [0], [0], [1], [0, 0, 1, 1], [], []>} : vector<128x16xbf16>, vector<16x32xbf16>, vector<128x32xf32> -> vector<128x32xf32>
    %c0_3 = arith.constant 0 : index
    %c0_4 = arith.constant 0 : index
    %5 = vector.load %arg3[%c0_3, %c0_4] : memref<1x32xf32, #tpu.memory_space<vmem>>, vector<1x32xf32>
    %6 = vector.broadcast %5 : vector<1x32xf32> to vector<128x32xf32>
    %7 = arith.addf %4, %6 : vector<128x32xf32>
    %c0_5 = arith.constant 0 : index
    %c0_6 = arith.constant 0 : index
    %8 = vector.load %arg4[%c0_5, %c0_6] : memref<128x32xf32, #tpu.memory_space<vmem>>, vector<128x32xf32>
    tpu.vector_store %arg4[%c0_5, %c0_6], %7 {strides = array<i32>} : memref<128x32xf32, #tpu.memory_space<vmem>>, vector<128x32xf32>,
    return
  }
  func.func @transform_0(%arg0: i32) -> (i32, i32) {
    %c0_i32 = arith.constant 0 : i32
    %c0_i32_0 = arith.constant 0 : i32
    %c0_i32_1 = arith.constant 0 : i32
    return %c0_i32, %c0_i32_0 : i32, i32
  }
  func.func @transform_1(%arg0: i32) -> (i32, i32) {
    %c0_i32 = arith.constant 0 : i32
    %c0_i32_0 = arith.constant 0 : i32
    %c0_i32_1 = arith.constant 0 : i32
    return %c0_i32, %c0_i32_0 : i32, i32
  }
  func.func @transform_2(%arg0: i32) -> (i32, i32) {
    %c0_i32 = arith.constant 0 : i32
    %c0_i32_0 = arith.constant 0 : i32
    %c0_i32_1 = arith.constant 0 : i32
    return %c0_i32, %c0_i32_0 : i32, i32
  }
  func.func @transform_3(%arg0: i32) -> (i32, i32) {
    %c0_i32 = arith.constant 0 : i32
    %c0_i32_0 = arith.constant 0 : i32
    %c0_i32_1 = arith.constant 0 : i32
    return %c0_i32, %c0_i32_0 : i32, i32
  }
}

</mosaic_0001>

<llo_original>
// kernel: tpu_custom_call.1
$region0: #{tpu_custom_call.1}
  #allocation0 [shape = 'u32[]', space=smem, size = 0x4, offset = 0x4, fixed_abs, tag = 'smem constant byte address 0x4 - core index']
  #allocation1 [shape = 'u32[72,128]{1,0:T(1,128)}', space=vmem, size = 0x9000, scoped, tag = 'internal scratch']
  %s0 = inlined_call_operand.vmem [shape: f32[128,16], index: 0, kind: input, shape index: {}]
  %s1 = inlined_call_operand.vmem [shape: f32[16,32], index: 1, kind: input, shape index: {}]
  %s2 = inlined_call_operand.vmem [shape: f32[1,32], index: 2, kind: input, shape index: {}]
  %s3 = inlined_call_operand.vmem [shape: f32[128,32], index: 3, kind: output, shape index: {}]
  %s4 = sld [smem:[#allocation0]]
  $region22: #{tpu_custom_call.1} parent=0
    _
  %s6 = ssub.s32 1, %s4
  %s7 = scalar_select 0, %s6, %s4
  // Predicated region
  $region2: #{tpu_custom_call.1} parent=0 // pred_check
    _
  $region3: #{tpu_custom_call.1} parent=0 // pred_check_branch
    %9 = sbr.rel (0) target = $region5
  $region4: #{tpu_custom_call.1} parent=0 // pred_region
    _
  $region5: #{tpu_custom_call.1} parent=0 // pred_fallthru
    _
  // Predicated region
  $region6: #{tpu_custom_call.1} parent=0 // pred_check
    _
  $region7: #{tpu_custom_call.1} parent=0 // pred_check_branch
    %11 = sbr.rel (0) target = $region9
  $region8: #{tpu_custom_call.1} parent=0 // pred_region
    _
  $region9: #{tpu_custom_call.1} parent=0 // pred_fallthru
    _
  // Predicated region
  $region10: #{tpu_custom_call.1} parent=0 // pred_check
    _
  $region11: #{tpu_custom_call.1} parent=0 // pred_check_branch
    %13 = sbr.rel (0) target = $region13
  $region12: #{tpu_custom_call.1} parent=0 // pred_region
    _
  $region13: #{tpu_custom_call.1} parent=0 // pred_fallthru
    _
  %v15 = vld [vmem:[%s0] sm:$0xff]
  %v16 = vld [vmem:[%s0 + $0x8] sm:$0xff]
  %v17 = vld [vmem:[%s0 + $0x10] sm:$0xff]
  %v18 = vld [vmem:[%s0 + $0x18] sm:$0xff]
  %v19 = vld [vmem:[%s0 + $0x20] sm:$0xff]
  %v20 = vld [vmem:[%s0 + $0x28] sm:$0xff]
  %v21 = vld [vmem:[%s0 + $0x30] sm:$0xff]
  %v22 = vld [vmem:[%s0 + $0x38] sm:$0xff]
  %v23 = vld [vmem:[%s0 + $0x40] sm:$0xff]
  %v24 = vld [vmem:[%s0 + $0x48] sm:$0xff]
  %v25 = vld [vmem:[%s0 + $0x50] sm:$0xff]
  %v26 = vld [vmem:[%s0 + $0x58] sm:$0xff]
  %v27 = vld [vmem:[%s0 + $0x60] sm:$0xff]
  %v28 = vld [vmem:[%s0 + $0x68] sm:$0xff]
  %v29 = vld [vmem:[%s0 + $0x70] sm:$0xff]
  %v30 = vld [vmem:[%s0 + $0x78] sm:$0xff]
  %v31 = vpack.c.bf16 %v16, %v15
  %v32 = vpack.c.bf16 %v18, %v17
  %v33 = vpack.c.bf16 %v20, %v19
  %v34 = vpack.c.bf16 %v22, %v21
  %v35 = vpack.c.bf16 %v24, %v23
  %v36 = vpack.c.bf16 %v26, %v25
  %v37 = vpack.c.bf16 %v28, %v27
  %v38 = vpack.c.bf16 %v30, %v29
  %v39 = vld [vmem:[%s1] sm:$0xff]
  %v40 = vld [vmem:[%s1 + $0x8] sm:$0xff]
  %v41 = vpack.c.bf16 %v40, %v39
  %v42 = vld [vmem:[%s2] sm:$0x1]
  %v44 = vperm.slane %v42, 0
  %vm46 = vcmask 130048
  %v48 = vsel %vm46, %v31, 0
  %v51 = vsel %vm46, %v32, 0
  %v54 = vsel %vm46, %v33, 0
  %v57 = vsel %vm46, %v34, 0
  %v60 = vsel %vm46, %v35, 0
  %v63 = vsel %vm46, %v36, 0
  %v66 = vsel %vm46, %v37, 0
  %v69 = vsel %vm46, %v38, 0
  %71 = vmatpush.bf16.msra.mxu0 0
  %72 = vmatpush.bf16.msra.mxu0 0
  %73 = vmatpush.bf16.msra.mxu0 0
  %74 = vmatpush.bf16.msra.mxu0 0
  %75 = vmatpush.bf16.msra.mxu0 0
  %76 = vmatpush.bf16.msra.mxu0 0
  %77 = vmatpush.bf16.msra.mxu0 0
  %78 = vmatpush.bf16.msra.mxu0 %v41
  %79 = vmatmul.bf16.gmra.mxu0 %v48
  %v80 = vpop.f32.mrf.mxu0
  %v81 = vadd.f32 %v44, %v80
  %v82 = vpop.f32.mrf.mxu0
  %v83 = vadd.f32 %v44, %v82
  %84 = vmatmul.bf16.gmra.mxu0 %v51
  %v85 = vpop.f32.mrf.mxu0
  %v86 = vadd.f32 %v44, %v85
  %v87 = vpop.f32.mrf.mxu0
  %v88 = vadd.f32 %v44, %v87
  %89 = vmatmul.bf16.gmra.mxu0 %v54
  %v90 = vpop.f32.mrf.mxu0
  %v91 = vadd.f32 %v44, %v90
  %v92 = vpop.f32.mrf.mxu0
  %v93 = vadd.f32 %v44, %v92
  %94 = vmatmul.bf16.gmra.mxu0 %v57
  %v95 = vpop.f32.mrf.mxu0
  %v96 = vadd.f32 %v44, %v95
  %v97 = vpop.f32.mrf.mxu0
  %v98 = vadd.f32 %v44, %v97
  %99 = vmatmul.bf16.gmra.mxu0 %v60
  %v100 = vpop.f32.mrf.mxu0
  %v101 = vadd.f32 %v44, %v100
  %v102 = vpop.f32.mrf.mxu0
  %v103 = vadd.f32 %v44, %v102
  %104 = vmatmul.bf16.gmra.mxu0 %v63
  %v105 = vpop.f32.mrf.mxu0
  %v106 = vadd.f32 %v44, %v105
  %v107 = vpop.f32.mrf.mxu0
  %v108 = vadd.f32 %v44, %v107
  %109 = vmatmul.bf16.gmra.mxu0 %v66
  %v110 = vpop.f32.mrf.mxu0
  %v111 = vadd.f32 %v44, %v110
  %v112 = vpop.f32.mrf.mxu0
  %v113 = vadd.f32 %v44, %v112
  %114 = vmatmul.bf16.gmra.mxu0 %v69
  %v115 = vpop.f32.mrf.mxu0
  %v116 = vadd.f32 %v44, %v115
  %v117 = vpop.f32.mrf.mxu0
  %v118 = vadd.f32 %v44, %v117
  %119 = vdwg.mxu0
  %vm120 = vcmask 261120
  %121 = vst.msk [vmem:[%s3] sm:$0xff] %vm120, %v81
  %122 = vst.msk [vmem:[%s3 + $0x8] sm:$0xff] %vm120, %v83
  %123 = vst.msk [vmem:[%s3 + $0x10] sm:$0xff] %vm120, %v86
  %124 = vst.msk [vmem:[%s3 + $0x18] sm:$0xff] %vm120, %v88
  %125 = vst.msk [vmem:[%s3 + $0x20] sm:$0xff] %vm120, %v91
  %126 = vst.msk [vmem:[%s3 + $0x28] sm:$0xff] %vm120, %v93
  %127 = vst.msk [vmem:[%s3 + $0x30] sm:$0xff] %vm120, %v96
  %128 = vst.msk [vmem:[%s3 + $0x38] sm:$0xff] %vm120, %v98
  %129 = vst.msk [vmem:[%s3 + $0x40] sm:$0xff] %vm120, %v101
  %130 = vst.msk [vmem:[%s3 + $0x48] sm:$0xff] %vm120, %v103
  %131 = vst.msk [vmem:[%s3 + $0x50] sm:$0xff] %vm120, %v106
  %132 = vst.msk [vmem:[%s3 + $0x58] sm:$0xff] %vm120, %v108
  %133 = vst.msk [vmem:[%s3 + $0x60] sm:$0xff] %vm120, %v111
  %134 = vst.msk [vmem:[%s3 + $0x68] sm:$0xff] %vm120, %v113
  %135 = vst.msk [vmem:[%s3 + $0x70] sm:$0xff] %vm120, %v116
  %136 = vst.msk [vmem:[%s3 + $0x78] sm:$0xff] %vm120, %v118
  // Predicated region
  $region14: #{tpu_custom_call.1} parent=0 // pred_check
    _
  $region15: #{tpu_custom_call.1} parent=0 // pred_check_branch
    %138 = sbr.rel (0) target = $region17
  $region16: #{tpu_custom_call.1} parent=0 // pred_region
    _
  $region17: #{tpu_custom_call.1} parent=0 // pred_fallthru
    _
  // Predicated region
  $region18: #{tpu_custom_call.1} parent=0 // pred_check
    _
  $region19: #{tpu_custom_call.1} parent=0 // pred_check_branch
    %140 = sbr.rel (0) target = $region21
  $region20: #{tpu_custom_call.1} parent=0 // pred_region
    _
  $region21: #{tpu_custom_call.1} parent=0 // pred_fallthru
    _

</llo_original>
